<compile_context>
chip_gen: v7x
topology: tpu7x:2x2x1
jax: 0.10.0
libtpu: 0.0.40
codegen_flags: <defaults>
</compile_context>

<pallas_src>
import math
from functools import partial

import jax
import jax.numpy as jnp
from jax.experimental import pallas as pl
from jax.experimental.pallas import tpu as pltpu


def _specificity_kernel(pred_ref, target_ref, out_ref, tn_acc, den_acc, *,
                        thresh, eps, n_total, n_chunk):
    k = pl.program_id(1)

    @pl.when(k == 0)
    def _():
        tn_acc[...] = jnp.zeros_like(tn_acc)
        den_acc[...] = jnp.zeros_like(den_acc)

    pred = pred_ref[...]          # (n_chunk, tile_f), native dtype
    target = target_ref[...]      # (n_chunk, tile_f), native dtype

    # Rows past N in the (padded) last batch chunk must not contribute.
    row = jax.lax.broadcasted_iota(jnp.int32, pred.shape, 0) + k * n_chunk
    row_valid = row < n_total

    target_zero = jnp.logical_and(target == 0, row_valid)
    # (pred_thresh == target) & (target == 0)  <=>  !(pred > thresh) & (target == 0)
    # (logical_not handles NaN pred exactly like the reference: NaN > t is False)
    tn_mask = jnp.logical_and(jnp.logical_not(pred > thresh), target_zero)

    tn_acc[...] += jnp.sum(tn_mask.astype(jnp.float32), axis=0, keepdims=True)
    den_acc[...] += jnp.sum(target_zero.astype(jnp.float32), axis=0, keepdims=True)

    @pl.when(k == pl.num_programs(1) - 1)
    def _():
        # fp + tn == count(target == 0) == den_acc
        out_ref[...] = tn_acc[...] / (den_acc[...] + eps)


def specificity(pred, target, thresh=0.5, eps=1e-5, *,
                n_chunk=None, vmem_budget_bytes=12 * 1024 * 1024,
                max_tile_f=8192):
    """Specificity reduced over dim 0. Returns float32 of shape pred.shape[1:]."""
    assert pred.shape == target.shape, "pred/target shape mismatch"
    N = pred.shape[0]
    trailing = pred.shape[1:]
    F = int(math.prod(trailing)) if trailing else 1

    # Flatten trailing dims — no dtype cast, no padding (no extra HBM passes).
    pred2d = jnp.reshape(pred, (N, F))
    target2d = jnp.reshape(target, (N, F))

    # Batch (reduction) chunk: whole N if small, else sublane-aligned chunks.
    if n_chunk is None:
        n_chunk = N if N <= 512 else 512
    n_chunk = min(n_chunk, N)
    if n_chunk < N:
        n_chunk = max(8, (n_chunk // 8) * 8)     # (8,128) sublane alignment
    num_k = pl.cdiv(N, n_chunk)

    # Feature tile: as wide as the VMEM budget allows.
    # Double-buffered inputs: 2 bufs * n_chunk * tile_f * (pred_bytes + tgt_bytes).
    itemsize = pred2d.dtype.itemsize + target2d.dtype.itemsize
    f_full = pl.cdiv(F, 128) * 128
    tile_f = vmem_budget_bytes // (2 * n_chunk * itemsize)
    tile_f = max(128, (tile_f // 128) * 128)
    tile_f = min(tile_f, f_full, max_tile_f)
    num_j = pl.cdiv(F, tile_f)

    out2d = pl.pallas_call(
        partial(_specificity_kernel, thresh=float(thresh), eps=float(eps),
                n_total=N, n_chunk=n_chunk),
        out_shape=jax.ShapeDtypeStruct((1, F), jnp.float32),
        grid_spec=pltpu.PrefetchScalarGridSpec(
            num_scalar_prefetch=0,
            grid=(num_j, num_k),
            in_specs=[
                pl.BlockSpec((n_chunk, tile_f), lambda j, k: (k, j)),
                pl.BlockSpec((n_chunk, tile_f), lambda j, k: (k, j)),
            ],
            out_specs=pl.BlockSpec((1, tile_f), lambda j, k: (0, j)),
            scratch_shapes=[
                pltpu.VMEM((1, tile_f), jnp.float32),   # tn accumulator
                pltpu.VMEM((1, tile_f), jnp.float32),   # denom accumulator
            ],
        ),
        compiler_params=pltpu.CompilerParams(
            dimension_semantics=("parallel", "arbitrary"),
            vmem_limit_bytes=32 * 1024 * 1024,
        ),
    )(pred2d, target2d)

    res = out2d[0, :F]
    return jnp.reshape(res, trailing)


def _reference(pred, target, thresh=0.5, eps=1e-5):
    pred_thresh = (pred > thresh).astype(jnp.float32)
    tzero = (target == 0.0)
    tn = jnp.sum(((pred_thresh == target) & tzero).astype(jnp.float32), axis=0)
    fp = jnp.sum(((pred_thresh != target) & tzero).astype(jnp.float32), axis=0)
    return tn / (fp + tn + eps)


if __name__ == "__main__":
    key = jax.random.PRNGKey(0)
    k1, k2, k3, k4 = jax.random.split(key, 4)

    # Test 1: shapes implied by the module (N, C, H, W), float32.
    N, C, H, W = 8, 4, 16, 16
    pred = jax.random.uniform(k1, (N, C, H, W), dtype=jnp.float32)
    target = (jax.random.uniform(k2, (N, C, H, W)) > 0.5).astype(jnp.float32)
    out = jax.block_until_ready(specificity(pred, target))
    ref = _reference(pred, target)
    assert out.shape == (C, H, W)
    assert jnp.allclose(out, ref, atol=1e-6, rtol=1e-6)

    # Test 2: ragged batch chunking (N % n_chunk != 0) and F not a multiple
    # of 128 — exercises the in-kernel row mask and lane-edge handling.
    N2, C2, H2, W2 = 20, 3, 5, 7
    pred2 = jax.random.uniform(k3, (N2, C2, H2, W2), dtype=jnp.float32)
    target2 = (jax.random.uniform(k4, (N2, C2, H2, W2)) > 0.5).astype(jnp.float32)
    out2 = jax.block_until_ready(specificity(pred2, target2, n_chunk=8))
    ref2 = _reference(pred2, target2)
    assert out2.shape == (C2, H2, W2)
    assert jnp.allclose(out2, ref2, atol=1e-6, rtol=1e-6)

    # Test 3: narrow native dtypes go straight into the kernel (no wrapper cast).
    pred3 = pred.astype(jnp.bfloat16)
    target3 = target.astype(jnp.int8)
    out3 = jax.block_until_ready(specificity(pred3, target3))
    ref3 = _reference(pred3.astype(jnp.float32), target3.astype(jnp.float32))
    assert jnp.allclose(out3, ref3, atol=1e-6, rtol=1e-6)

    print("KERNEL_OK")
</pallas_src>

<mosaic_0001>
module attributes {stable_mosaic.version = 11 : i64} {
  func.func @_specificity_kernel(%arg0: i32, %arg1: i32, %arg2: memref<8x1024xf32, #tpu.memory_space<vmem>>, %arg3: memref<8x1024xf32, #tpu.memory_space<vmem>>, %arg4: memref<1x1024xf32, #tpu.memory_space<vmem>>, %arg5: memref<1x1024xf32, #tpu.memory_space<vmem>>, %arg6: memref<1x1024xf32, #tpu.memory_space<vmem>>) attributes {dimension_semantics = [#tpu.dimension_semantics<parallel>, #tpu.dimension_semantics<arbitrary>], iteration_bounds = array<i64: 1, 1>, scalar_prefetch = 0 : i64, scratch_operands = 2 : i64, tpu.core_type = #tpu.core_type<tc>, window_params = [{transform_indices = @transform_0, window_bounds = array<i64: 8, 1024>}, {transform_indices = @transform_1, window_bounds = array<i64: 8, 1024>}, {transform_indices = @transform_2, window_bounds = array<i64: 1, 1024>}]} {
    %c0_i32 = arith.constant 0 : i32
    %0 = arith.cmpi eq, %arg1, %c0_i32 : i32
    %1 = arith.extui %0 : i1 to i32
    %c0_i32_0 = arith.constant 0 : i32
    %2 = arith.cmpi ne, %1, %c0_i32_0 : i32
    scf.if %2 {
      %cst_19 = arith.constant 0.000000e+00 : f32
      %35 = vector.broadcast %cst_19 : f32 to vector<1x1024xf32>
      %c0_20 = arith.constant 0 : index
      %c0_21 = arith.constant 0 : index
      %36 = vector.load %arg5[%c0_20, %c0_21] : memref<1x1024xf32, #tpu.memory_space<vmem>>, vector<1x1024xf32>
      tpu.vector_store %arg5[%c0_20, %c0_21], %35 {strides = array<i32>} : memref<1x1024xf32, #tpu.memory_space<vmem>>, vector<1x1024xf32>,
      %cst_22 = arith.constant 0.000000e+00 : f32
      %37 = vector.broadcast %cst_22 : f32 to vector<1x1024xf32>
      %c0_23 = arith.constant 0 : index
      %c0_24 = arith.constant 0 : index
      %38 = vector.load %arg6[%c0_23, %c0_24] : memref<1x1024xf32, #tpu.memory_space<vmem>>, vector<1x1024xf32>
      tpu.vector_store %arg6[%c0_23, %c0_24], %37 {strides = array<i32>} : memref<1x1024xf32, #tpu.memory_space<vmem>>, vector<1x1024xf32>,
    } else {
    }
    %c0 = arith.constant 0 : index
    %c0_1 = arith.constant 0 : index
    %3 = vector.load %arg2[%c0, %c0_1] : memref<8x1024xf32, #tpu.memory_space<vmem>>, vector<8x1024xf32>
    %c0_2 = arith.constant 0 : index
    %c0_3 = arith.constant 0 : index
    %4 = vector.load %arg3[%c0_2, %c0_3] : memref<8x1024xf32, #tpu.memory_space<vmem>>, vector<8x1024xf32>
    %5 = tpu.iota {dimensions = array<i32: 0>} : vector<8x1024xi32>
    %c8_i32 = arith.constant 8 : i32
    %6 = arith.muli %arg1, %c8_i32 : i32
    %7 = vector.broadcast %6 : i32 to vector<8x1024xi32>
    %8 = arith.addi %5, %7 : vector<8x1024xi32>
    %c8_i32_4 = arith.constant 8 : i32
    %9 = vector.broadcast %c8_i32_4 : i32 to vector<8x1024xi32>
    %10 = arith.cmpi slt, %8, %9 : vector<8x1024xi32>
    %cst = arith.constant 0.000000e+00 : f32
    %11 = vector.broadcast %cst : f32 to vector<8x1024xf32>
    %12 = arith.cmpf oeq, %4, %11 : vector<8x1024xf32>
    %13 = arith.andi %12, %10 : vector<8x1024xi1>
    %cst_5 = arith.constant 5.000000e-01 : f32
    %14 = vector.broadcast %cst_5 : f32 to vector<8x1024xf32>
    %15 = arith.cmpf ogt, %3, %14 : vector<8x1024xf32>
    %cst_6 = arith.constant dense<true> : vector<8x1024xi1>
    %16 = arith.xori %15, %cst_6 : vector<8x1024xi1>
    %17 = arith.andi %16, %13 : vector<8x1024xi1>
    %c0_7 = arith.constant 0 : index
    %c0_8 = arith.constant 0 : index
    %18 = vector.load %arg5[%c0_7, %c0_8] : memref<1x1024xf32, #tpu.memory_space<vmem>>, vector<1x1024xf32>
    %19 = arith.extui %17 : vector<8x1024xi1> to vector<8x1024xi32>
    %20 = arith.sitofp %19 : vector<8x1024xi32> to vector<8x1024xf32>
    %cst_9 = arith.constant dense<0.000000e+00> : vector<1024xf32>
    %21 = vector.multi_reduction <add>, %20, %cst_9 [0] : vector<8x1024xf32> to vector<1024xf32>
    %22 = vector.shape_cast %21 : vector<1024xf32> to vector<1x1024xf32>
    %23 = arith.addf %18, %22 : vector<1x1024xf32>
    %c0_10 = arith.constant 0 : index
    %c0_11 = arith.constant 0 : index
    %24 = vector.load %arg5[%c0_10, %c0_11] : memref<1x1024xf32, #tpu.memory_space<vmem>>, vector<1x1024xf32>
    tpu.vector_store %arg5[%c0_10, %c0_11], %23 {strides = array<i32>} : memref<1x1024xf32, #tpu.memory_space<vmem>>, vector<1x1024xf32>,
    %c0_12 = arith.constant 0 : index
    %c0_13 = arith.constant 0 : index
    %25 = vector.load %arg6[%c0_12, %c0_13] : memref<1x1024xf32, #tpu.memory_space<vmem>>, vector<1x1024xf32>
    %26 = arith.extui %13 : vector<8x1024xi1> to vector<8x1024xi32>
    %27 = arith.sitofp %26 : vector<8x1024xi32> to vector<8x1024xf32>
    %cst_14 = arith.constant dense<0.000000e+00> : vector<1024xf32>
    %28 = vector.multi_reduction <add>, %27, %cst_14 [0] : vector<8x1024xf32> to vector<1024xf32>
    %29 = vector.shape_cast %28 : vector<1024xf32> to vector<1x1024xf32>
    %30 = arith.addf %25, %29 : vector<1x1024xf32>
    %c0_15 = arith.constant 0 : index
    %c0_16 = arith.constant 0 : index
    %31 = vector.load %arg6[%c0_15, %c0_16] : memref<1x1024xf32, #tpu.memory_space<vmem>>, vector<1x1024xf32>
    tpu.vector_store %arg6[%c0_15, %c0_16], %30 {strides = array<i32>} : memref<1x1024xf32, #tpu.memory_space<vmem>>, vector<1x1024xf32>,
    %c0_i32_17 = arith.constant 0 : i32
    %32 = arith.cmpi eq, %arg1, %c0_i32_17 : i32
    %33 = arith.extui %32 : i1 to i32
    %c0_i32_18 = arith.constant 0 : i32
    %34 = arith.cmpi ne, %33, %c0_i32_18 : i32
    scf.if %34 {
      %c0_19 = arith.constant 0 : index
      %c0_20 = arith.constant 0 : index
      %35 = vector.load %arg5[%c0_19, %c0_20] : memref<1x1024xf32, #tpu.memory_space<vmem>>, vector<1x1024xf32>
      %c0_21 = arith.constant 0 : index
      %c0_22 = arith.constant 0 : index
      %36 = vector.load %arg6[%c0_21, %c0_22] : memref<1x1024xf32, #tpu.memory_space<vmem>>, vector<1x1024xf32>
      %cst_23 = arith.constant 9.99999974E-6 : f32
      %37 = vector.broadcast %cst_23 : f32 to vector<1x1024xf32>
      %38 = arith.addf %36, %37 : vector<1x1024xf32>
      %39 = arith.divf %35, %38 : vector<1x1024xf32>
      %c0_24 = arith.constant 0 : index
      %c0_25 = arith.constant 0 : index
      %40 = vector.load %arg4[%c0_24, %c0_25] : memref<1x1024xf32, #tpu.memory_space<vmem>>, vector<1x1024xf32>
      tpu.vector_store %arg4[%c0_24, %c0_25], %39 {strides = array<i32>} : memref<1x1024xf32, #tpu.memory_space<vmem>>, vector<1x1024xf32>,
    } else {
    }
    return
  }
  func.func @transform_0(%arg0: i32, %arg1: i32) -> (i32, i32) {
    %c0_i32 = arith.constant 0 : i32
    return %arg1, %arg0 : i32, i32
  }
  func.func @transform_1(%arg0: i32, %arg1: i32) -> (i32, i32) {
    %c0_i32 = arith.constant 0 : i32
    return %arg1, %arg0 : i32, i32
  }
  func.func @transform_2(%arg0: i32, %arg1: i32) -> (i32, i32) {
    %c0_i32 = arith.constant 0 : i32
    %c0_i32_0 = arith.constant 0 : i32
    return %c0_i32, %arg0 : i32, i32
  }
}

</mosaic_0001>

<llo_original>
// kernel: tpu_custom_call.1
$region0: #{tpu_custom_call.1}
  #allocation0 [shape = 'u32[]', space=smem, size = 0x4, offset = 0x4, fixed_abs, tag = 'smem constant byte address 0x4 - core index']
  #allocation1 [shape = 'u32[144,128]{1,0:T(1,128)}', space=vmem, size = 0x12000, scoped, tag = 'internal scratch']
  #allocation2 [shape = 'f32[1,1024]{1,0:T(1,128)}', space=vmem, size = 0x1000, scoped, tag = 'scratch operand']
  #allocation3 [shape = 'f32[1,1024]{1,0:T(1,128)}', space=vmem, size = 0x1000, scoped, tag = 'scratch operand']
  %s0 = inlined_call_operand.hbm [shape: f32[8,1024], index: 0, kind: input, shape index: {}]
  %s1 = inlined_call_operand.hbm [shape: f32[8,1024], index: 1, kind: input, shape index: {}]
  %s2 = inlined_call_operand.hbm [shape: f32[1,1024], index: 2, kind: output, shape index: {}]
  %s3 = sld [smem:[#allocation0]]
  $region34: #{tpu_custom_call.1} parent=0
    _
  %s5 = ssub.s32 1, %s3
  %s6 = scalar_select 0, %s5, %s3
  $region1: #{tpu_custom_call.1} parent=0
    #allocation4 [shape = 'u8[32768]{0}', space=vmem, size = 0x8000, scoped, tag = 'input window, operand 0, single buffered']
    #allocation5 [shape = 's32[1]{0}', space=sflag, size = 0x4, scoped, tag = 'scoped memory for tpu_custom_call.1']
    #allocation6 [shape = 's32[1]{0}', space=sflag, size = 0x4, scoped, tag = 'scoped memory for tpu_custom_call.1']
    #allocation7 [shape = 'u8[32768]{0}', space=vmem, size = 0x8000, scoped, tag = 'input window, operand 1, single buffered']
    #allocation8 [shape = 's32[1]{0}', space=sflag, size = 0x4, scoped, tag = 'scoped memory for tpu_custom_call.1']
    #allocation9 [shape = 'u8[4096]{0}', space=vmem, size = 0x1000, scoped, tag = 'output window, operand 0, single buffered']
    %7 = vsyncpa [#allocation5], 0
    %8 = vsyncpa [#allocation8], 0
    %9 = vsyncpa [#allocation6], 0
    // Predicated region
    $region2: #{tpu_custom_call.1} parent=1 // pred_check
      _
    $region3: #{tpu_custom_call.1} parent=1 // pred_check_branch
      %11 = sbr.rel (0) target = $region5
    $region4: #{tpu_custom_call.1} parent=1 // pred_region
      %s13 = ssub.s32 1024, 1024
      %14 = vsyncadd [#allocation5], %s13
      %s16 = sshll.u32 [#allocation4], 4
      %s17 = int_to_ptr.vmem [resolvable:$true] %s16
      %19 = dma.hbm_to_vmem [thread:$0]  %s0, 1024, %s17, [#allocation5]
    $region5: #{tpu_custom_call.1} parent=1 // pred_fallthru
      _
    // Predicated region
    $region6: #{tpu_custom_call.1} parent=1 // pred_check
      _
    $region7: #{tpu_custom_call.1} parent=1 // pred_check_branch
      %21 = sbr.rel (0) target = $region9
    $region8: #{tpu_custom_call.1} parent=1 // pred_region
      %s23 = ssub.s32 1024, 1024
      %24 = vsyncadd [#allocation8], %s23
      %s26 = sshll.u32 [#allocation7], 4
      %s27 = int_to_ptr.vmem [resolvable:$true] %s26
      %29 = dma.hbm_to_vmem [thread:$0]  %s1, 1024, %s27, [#allocation8]
    $region9: #{tpu_custom_call.1} parent=1 // pred_fallthru
      _
    // Predicated region
    $region10: #{tpu_custom_call.1} parent=1 // pred_check
      _
    $region11: #{tpu_custom_call.1} parent=1 // pred_check_branch
      %31 = sbr.rel (0) target = $region13
    $region12: #{tpu_custom_call.1} parent=1 // pred_region
      %32 = dma.done [#allocation5], 1024
    $region13: #{tpu_custom_call.1} parent=1 // pred_fallthru
      _
    // Predicated region
    $region14: #{tpu_custom_call.1} parent=1 // pred_check
      _
    $region15: #{tpu_custom_call.1} parent=1 // pred_check_branch
      %34 = sbr.rel (0) target = $region17
    $region16: #{tpu_custom_call.1} parent=1 // pred_region
      %35 = dma.done [#allocation8], 1024
    $region17: #{tpu_custom_call.1} parent=1 // pred_fallthru
      _
    %p36 = scmp.eq.s32.totalorder 0, 0
    // Predicated region
    $region18: #{tpu_custom_call.1} parent=1 // pred_check
      %p37 = pneg %p36
    $region19: #{tpu_custom_call.1} parent=1 // pred_check_branch
      %39 = sbr.rel (%p37) target = $region21
    $region20: #{tpu_custom_call.1} parent=1 // pred_region
      %40 = vst [vmem:[#allocation2] sm:$0xff] 0.0
      %41 = vst [vmem:[#allocation3] sm:$0xff] 0.0
    $region21: #{tpu_custom_call.1} parent=1 // pred_fallthru
      _
    %v42 = vld [vmem:[#allocation4] sm:$0xff]
    %v43 = vld [vmem:[#allocation4 + $0x8] sm:$0xff]
    %v44 = vld [vmem:[#allocation4 + $0x10] sm:$0xff]
    %v45 = vld [vmem:[#allocation4 + $0x18] sm:$0xff]
    %v46 = vld [vmem:[#allocation4 + $0x20] sm:$0xff]
    %v47 = vld [vmem:[#allocation4 + $0x28] sm:$0xff]
    %v48 = vld [vmem:[#allocation4 + $0x30] sm:$0xff]
    %v49 = vld [vmem:[#allocation4 + $0x38] sm:$0xff]
    %v50 = vld [vmem:[#allocation7] sm:$0xff]
    %v51 = vld [vmem:[#allocation7 + $0x8] sm:$0xff]
    %v52 = vld [vmem:[#allocation7 + $0x10] sm:$0xff]
    %v53 = vld [vmem:[#allocation7 + $0x18] sm:$0xff]
    %v54 = vld [vmem:[#allocation7 + $0x20] sm:$0xff]
    %v55 = vld [vmem:[#allocation7 + $0x28] sm:$0xff]
    %v56 = vld [vmem:[#allocation7 + $0x30] sm:$0xff]
    %v57 = vld [vmem:[#allocation7 + $0x38] sm:$0xff]
    %v58 = vlaneseq
    %v59 = vshrl.u32 %v58, 7
    %s60 = smul.u32 0, 8
    %v61 = vstv %s60
    %v62 = vadd.s32 %v59, %v61
    %vm63 = vcmp.lt.s32.totalorder %v62, 8
    %vm64 = vcmp.eq.f32.partialorder %v50, 0.0
    %vm65 = vcmp.eq.f32.partialorder %v51, 0.0
    %vm66 = vcmp.eq.f32.partialorder %v52, 0.0
    %vm67 = vcmp.eq.f32.partialorder %v53, 0.0
    %vm68 = vcmp.eq.f32.partialorder %v54, 0.0
    %vm69 = vcmp.eq.f32.partialorder %v55, 0.0
    %vm70 = vcmp.eq.f32.partialorder %v56, 0.0
    %vm71 = vcmp.eq.f32.partialorder %v57, 0.0
    %vm72 = vmand %vm64, %vm63
    %vm73 = vmand %vm65, %vm63
    %vm74 = vmand %vm66, %vm63
    %vm75 = vmand %vm67, %vm63
    %vm76 = vmand %vm68, %vm63
    %vm77 = vmand %vm69, %vm63
    %vm78 = vmand %vm70, %vm63
    %vm79 = vmand %vm71, %vm63
    %vm80 = vcmp.gt.f32.partialorder %v42, 0.5
    %vm81 = vcmp.gt.f32.partialorder %v43, 0.5
    %vm82 = vcmp.gt.f32.partialorder %v44, 0.5
    %vm83 = vcmp.gt.f32.partialorder %v45, 0.5
    %vm84 = vcmp.gt.f32.partialorder %v46, 0.5
    %vm85 = vcmp.gt.f32.partialorder %v47, 0.5
    %vm86 = vcmp.gt.f32.partialorder %v48, 0.5
    %vm87 = vcmp.gt.f32.partialorder %v49, 0.5
    %vm88 = vmxor %vm80, 1
    %vm89 = vmxor %vm81, 1
    %vm90 = vmxor %vm82, 1
    %vm91 = vmxor %vm83, 1
    %vm92 = vmxor %vm84, 1
    %vm93 = vmxor %vm85, 1
    %vm94 = vmxor %vm86, 1
    %vm95 = vmxor %vm87, 1
    %vm96 = vmand %vm88, %vm72
    %vm97 = vmand %vm89, %vm73
    %vm98 = vmand %vm90, %vm74
    %vm99 = vmand %vm91, %vm75
    %vm100 = vmand %vm92, %vm76
    %vm101 = vmand %vm93, %vm77
    %vm102 = vmand %vm94, %vm78
    %vm103 = vmand %vm95, %vm79
    %v104 = vld [vmem:[#allocation2] sm:$0xff]
    %v105 = vsel %vm96, 1, 0
    %v106 = vsel %vm97, 1, 0
    %v107 = vsel %vm98, 1, 0
    %v108 = vsel %vm99, 1, 0
    %v109 = vsel %vm100, 1, 0
    %v110 = vsel %vm101, 1, 0
    %v111 = vsel %vm102, 1, 0
    %v112 = vsel %vm103, 1, 0
    %v113 = vcvt.s32.f32 %v105
    %v114 = vcvt.s32.f32 %v106
    %v115 = vcvt.s32.f32 %v107
    %v116 = vcvt.s32.f32 %v108
    %v117 = vcvt.s32.f32 %v109
    %v118 = vcvt.s32.f32 %v110
    %v119 = vcvt.s32.f32 %v111
    %v120 = vcvt.s32.f32 %v112
    %v121 = vrot.slane %v113, 4
    %v122 = vadd.f32 %v113, %v121
    %v123 = vrot.slane %v122, 2
    %v124 = vadd.f32 %v122, %v123
    %v125 = vrot.slane %v124, 1
    %v126 = vadd.f32 %v124, %v125
    %v127 = vrot.slane %v114, 4
    %v128 = vadd.f32 %v114, %v127
    %v129 = vrot.slane %v128, 2
    %v130 = vadd.f32 %v128, %v129
    %v131 = vrot.slane %v130, 1
    %v132 = vadd.f32 %v130, %v131
    %v133 = vrot.slane %v115, 4
    %v134 = vadd.f32 %v115, %v133
    %v135 = vrot.slane %v134, 2
    %v136 = vadd.f32 %v134, %v135
    %v137 = vrot.slane %v136, 1
    %v138 = vadd.f32 %v136, %v137
    %v139 = vrot.slane %v116, 4
    %v140 = vadd.f32 %v116, %v139
    %v141 = vrot.slane %v140, 2
    %v142 = vadd.f32 %v140, %v141
    %v143 = vrot.slane %v142, 1
    %v144 = vadd.f32 %v142, %v143
    %v145 = vrot.slane %v117, 4
    %v146 = vadd.f32 %v117, %v145
    %v147 = vrot.slane %v146, 2
    %v148 = vadd.f32 %v146, %v147
    %v149 = vrot.slane %v148, 1
    %v150 = vadd.f32 %v148, %v149
    %v151 = vrot.slane %v118, 4
    %v152 = vadd.f32 %v118, %v151
    %v153 = vrot.slane %v152, 2
    %v154 = vadd.f32 %v152, %v153
    %v155 = vrot.slane %v154, 1
    %v156 = vadd.f32 %v154, %v155
    %v157 = vrot.slane %v119, 4
    %v158 = vadd.f32 %v119, %v157
    %v159 = vrot.slane %v158, 2
    %v160 = vadd.f32 %v158, %v159
    %v161 = vrot.slane %v160, 1
    %v162 = vadd.f32 %v160, %v161
    %v163 = vrot.slane %v120, 4
    %v164 = vadd.f32 %v120, %v163
    %v165 = vrot.slane %v164, 2
    %v166 = vadd.f32 %v164, %v165
    %v167 = vrot.slane %v166, 1
    %v168 = vadd.f32 %v166, %v167
    %v177 = vcombine.low %v126, %v132
    %v178 = vcombine.low %v138, %v144
    %v179 = vcombine.low %v150, %v156
    %v180 = vcombine.low %v162, %v168
    %v182 = vunpack.c.l.s4 1966171168
    %v183 = vunpack.c.0.s8 %v182
    %v184 = vlaneseq
    %v185 = vshrl.u32 %v184, 7
    %v186 = vsub.s32 %v183, %v185
    %v187 = vrot.slane %v177, %v186
    %v189 = vunpack.c.l.s4 1966171168
    %v190 = vunpack.c.0.s8 %v189
    %v191 = vlaneseq
    %v192 = vshrl.u32 %v191, 7
    %v193 = vsub.s32 %v190, %v192
    %v194 = vrot.slane %v178, %v193
    %v196 = vunpack.c.l.s4 1966171168
    %v197 = vunpack.c.0.s8 %v196
    %v198 = vlaneseq
    %v199 = vshrl.u32 %v198, 7
    %v200 = vsub.s32 %v197, %v199
    %v201 = vrot.slane %v179, %v200
    %v203 = vunpack.c.l.s4 1966171168
    %v204 = vunpack.c.0.s8 %v203
    %v205 = vlaneseq
    %v206 = vshrl.u32 %v205, 7
    %v207 = vsub.s32 %v204, %v206
    %v208 = vrot.slane %v180, %v207
    %v209 = vcombine.low %v187, %v194
    %v210 = vcombine.low %v201, %v208
    %v212 = vunpack.c.l.s4 1966171168
    %v213 = vunpack.c.0.s8 %v212
    %v214 = vlaneseq
    %v215 = vshrl.u32 %v214, 7
    %v216 = vsub.s32 %v213, %v215
    %v217 = vrot.slane %v209, %v216
    %v219 = vunpack.c.l.s4 1966171168
    %v220 = vunpack.c.0.s8 %v219
    %v221 = vlaneseq
    %v222 = vshrl.u32 %v221, 7
    %v223 = vsub.s32 %v220, %v222
    %v224 = vrot.slane %v210, %v223
    %v225 = vcombine.low %v217, %v224
    %v227 = vadd.f32 %v104, %v225
    %228 = vst [vmem:[#allocation2] sm:$0xff] %v227
    %v229 = vld [vmem:[#allocation3] sm:$0xff]
    %v230 = vsel %vm72, 1, 0
    %v231 = vsel %vm73, 1, 0
    %v232 = vsel %vm74, 1, 0
    %v233 = vsel %vm75, 1, 0
    %v234 = vsel %vm76, 1, 0
    %v235 = vsel %vm77, 1, 0
    %v236 = vsel %vm78, 1, 0
    %v237 = vsel %vm79, 1, 0
    %v238 = vcvt.s32.f32 %v230
    %v239 = vcvt.s32.f32 %v231
    %v240 = vcvt.s32.f32 %v232
    %v241 = vcvt.s32.f32 %v233
    %v242 = vcvt.s32.f32 %v234
    %v243 = vcvt.s32.f32 %v235
    %v244 = vcvt.s32.f32 %v236
    %v245 = vcvt.s32.f32 %v237
    %v246 = vrot.slane %v238, 4
    %v247 = vadd.f32 %v238, %v246
    %v248 = vrot.slane %v247, 2
    %v249 = vadd.f32 %v247, %v248
    %v250 = vrot.slane %v249, 1
    %v251 = vadd.f32 %v249, %v250
    %v252 = vrot.slane %v239, 4
    %v253 = vadd.f32 %v239, %v252
    %v254 = vrot.slane %v253, 2
    %v255 = vadd.f32 %v253, %v254
    %v256 = vrot.slane %v255, 1
    %v257 = vadd.f32 %v255, %v256
    %v258 = vrot.slane %v240, 4
    %v259 = vadd.f32 %v240, %v258
    %v260 = vrot.slane %v259, 2
    %v261 = vadd.f32 %v259, %v260
    %v262 = vrot.slane %v261, 1
    %v263 = vadd.f32 %v261, %v262
    %v264 = vrot.slane %v241, 4
    %v265 = vadd.f32 %v241, %v264
    %v266 = vrot.slane %v265, 2
    %v267 = vadd.f32 %v265, %v266
    %v268 = vrot.slane %v267, 1
    %v269 = vadd.f32 %v267, %v268
    %v270 = vrot.slane %v242, 4
    %v271 = vadd.f32 %v242, %v270
    %v272 = vrot.slane %v271, 2
    %v273 = vadd.f32 %v271, %v272
    %v274 = vrot.slane %v273, 1
    %v275 = vadd.f32 %v273, %v274
    %v276 = vrot.slane %v243, 4
    %v277 = vadd.f32 %v243, %v276
    %v278 = vrot.slane %v277, 2
    %v279 = vadd.f32 %v277, %v278
    %v280 = vrot.slane %v279, 1
    %v281 = vadd.f32 %v279, %v280
    %v282 = vrot.slane %v244, 4
    %v283 = vadd.f32 %v244, %v282
    %v284 = vrot.slane %v283, 2
    %v285 = vadd.f32 %v283, %v284
    %v286 = vrot.slane %v285, 1
    %v287 = vadd.f32 %v285, %v286
    %v288 = vrot.slane %v245, 4
    %v289 = vadd.f32 %v245, %v288
    %v290 = vrot.slane %v289, 2
    %v291 = vadd.f32 %v289, %v290
    %v292 = vrot.slane %v291, 1
    %v293 = vadd.f32 %v291, %v292
    %v302 = vcombine.low %v251, %v257
    %v303 = vcombine.low %v263, %v269
    %v304 = vcombine.low %v275, %v281
    %v305 = vcombine.low %v287, %v293
    %v307 = vunpack.c.l.s4 1966171168
    %v308 = vunpack.c.0.s8 %v307
    %v309 = vlaneseq
    %v310 = vshrl.u32 %v309, 7
    %v311 = vsub.s32 %v308, %v310
    %v312 = vrot.slane %v302, %v311
    %v314 = vunpack.c.l.s4 1966171168
    %v315 = vunpack.c.0.s8 %v314
    %v316 = vlaneseq
    %v317 = vshrl.u32 %v316, 7
    %v318 = vsub.s32 %v315, %v317
    %v319 = vrot.slane %v303, %v318
    %v321 = vunpack.c.l.s4 1966171168
    %v322 = vunpack.c.0.s8 %v321
    %v323 = vlaneseq
    %v324 = vshrl.u32 %v323, 7
    %v325 = vsub.s32 %v322, %v324
    %v326 = vrot.slane %v304, %v325
    %v328 = vunpack.c.l.s4 1966171168
    %v329 = vunpack.c.0.s8 %v328
    %v330 = vlaneseq
    %v331 = vshrl.u32 %v330, 7
    %v332 = vsub.s32 %v329, %v331
    %v333 = vrot.slane %v305, %v332
    %v334 = vcombine.low %v312, %v319
    %v335 = vcombine.low %v326, %v333
    %v337 = vunpack.c.l.s4 1966171168
    %v338 = vunpack.c.0.s8 %v337
    %v339 = vlaneseq
    %v340 = vshrl.u32 %v339, 7
    %v341 = vsub.s32 %v338, %v340
    %v342 = vrot.slane %v334, %v341
    %v344 = vunpack.c.l.s4 1966171168
    %v345 = vunpack.c.0.s8 %v344
    %v346 = vlaneseq
    %v347 = vshrl.u32 %v346, 7
    %v348 = vsub.s32 %v345, %v347
    %v349 = vrot.slane %v335, %v348
    %v350 = vcombine.low %v342, %v349
    %v352 = vadd.f32 %v229, %v350
    %353 = vst [vmem:[#allocation3] sm:$0xff] %v352
    // Predicated region
    $region22: #{tpu_custom_call.1} parent=1 // pred_check
      %p354 = pneg %p36
    $region23: #{tpu_custom_call.1} parent=1 // pred_check_branch
      %356 = sbr.rel (%p354) target = $region25
    $region24: #{tpu_custom_call.1} parent=1 // pred_region
      %v357 = vld [vmem:[#allocation2] sm:$0xff]
      %v358 = vld [vmem:[#allocation3] sm:$0xff]
      %v359 = vadd.f32 %v358, 1e-05
      %v360 = vrcp.pop %v359
      %v361 = vmul.f32 %v357, %v360
      %362 = vst [vmem:[#allocation9] sm:$0xff] %v361
    $region25: #{tpu_custom_call.1} parent=1 // pred_fallthru
      _
    // Predicated region
    $region26: #{tpu_custom_call.1} parent=1 // pred_check
      _
    $region27: #{tpu_custom_call.1} parent=1 // pred_check_branch
      %364 = sbr.rel (0) target = $region29
    $region28: #{tpu_custom_call.1} parent=1 // pred_region
      %s366 = ssub.s32 128, 128
      %367 = vsyncadd [#allocation6], %s366
      %s369 = sshll.u32 [#allocation9], 4
      %s370 = int_to_ptr.vmem [resolvable:$true] %s369
      %372 = dma.vmem_to_hbm [thread:$0]  %s370, 128, %s2, [#allocation6]
    $region29: #{tpu_custom_call.1} parent=1 // pred_fallthru
      _
    // Predicated region
    $region30: #{tpu_custom_call.1} parent=1 // pred_check
      _
    $region31: #{tpu_custom_call.1} parent=1 // pred_check_branch
      %374 = sbr.rel (0) target = $region33
    $region32: #{tpu_custom_call.1} parent=1 // pred_region
      %375 = dma.done [#allocation6], 128
    $region33: #{tpu_custom_call.1} parent=1 // pred_fallthru
      _
    %376 = vsyncpa [#allocation5], 1
    %377 = vsyncpa [#allocation8], 1
    %378 = vsyncpa [#allocation6], 1

</llo_original>
